<compile_context>
chip_gen: v7x
topology: tpu7x:2x2x1
jax: 0.10.0
libtpu: 0.0.40
codegen_flags: <defaults>
</compile_context>

<pallas_src>
import jax
import jax.numpy as jnp
from jax.experimental import pallas as pl
from jax.experimental.pallas import tpu as pltpu

_LANES = 128      # vreg lane width (last dim of every block)
_SUBLANES = 8     # vreg sublane count
_TR_CAP = 4096    # rows per block -> 4096*128*4B = 2 MiB f32 per input buffer


def _cdiv(a, b):
    return -(-a // b)


def _round_up(a, b):
    return _cdiv(a, b) * b


def _make_bce_kernel(total, steps, tr, need_mask):
    """Kernel over a (tr, 128) block; accumulates into a (1, 8, 128) output block."""
    block_elems = tr * _LANES

    def kernel(m_ref, t_ref, acc_ref):
        i = pl.program_id(1)

        @pl.when(i == 0)
        def _():
            acc_ref[...] = jnp.zeros_like(acc_ref)

        m = m_ref[...].astype(jnp.float32)
        t = t_ref[...].astype(jnp.float32)
        # Stable form of -(t*log(sigmoid(m)) + (1-t)*log(1-sigmoid(m))).
        bce = jnp.maximum(m, 0.0) - m * t + jnp.log(1.0 + jnp.exp(-jnp.abs(m)))

        if need_mask:
            # Zero out padded tail elements.  (Fine in int32 for totals < 2^31.)
            block_id = pl.program_id(0) * steps + i
            rem = total - block_id * block_elems      # valid elements in this block
            row = jax.lax.broadcasted_iota(jnp.int32, (tr, _LANES), 0)
            lane = jax.lax.broadcasted_iota(jnp.int32, (tr, _LANES), 1)
            bce = jnp.where(row * _LANES + lane < rem, bce, 0.0)

        # (tr,128) -> (tr/8, 8, 128), sum over the leading (major) axis:
        # pure VALU vreg adds, no XLU cross-lane work per step.
        partial = jnp.sum(bce.reshape(tr // _SUBLANES, _SUBLANES, _LANES), axis=0)
        acc_ref[...] += partial[jnp.newaxis]

    return kernel


def tsp_loss(raw_scores, target):
    bs, n, n2 = raw_scores.shape
    assert n == n2, "raw_scores must be (bs, n_vertices, n_vertices)"
    assert target.shape == raw_scores.shape

    total = bs * n * n
    rows_needed = _cdiv(total, _LANES)

    # Block sizing: biggest lane-dense block up to ~2 MiB f32-equivalent.
    if rows_needed <= _TR_CAP:
        tr = _round_up(rows_needed, _SUBLANES)
        num_blocks = 1
    else:
        tr = _TR_CAP
        num_blocks = _cdiv(rows_needed, tr)

    # Two-way outer split for v7x megacore (harmless sequential outer loop on v5e/v6e).
    nc = 2 if num_blocks >= 2 else 1
    num_blocks = _round_up(num_blocks, nc)
    steps = num_blocks // nc

    padded_rows = num_blocks * tr
    padded_total = padded_rows * _LANES
    need_mask = padded_total != total

    def _flat(x):
        x = x.reshape(-1)
        pad = padded_total - x.shape[0]
        if pad:
            x = jnp.pad(x, (0, pad))
        return x.reshape(padded_rows, _LANES)

    # Inputs consumed in their native dtype; the f32 cast happens on the VMEM tile.
    m2d = _flat(raw_scores)
    t2d = _flat(target)

    kernel = _make_bce_kernel(total, steps, tr, need_mask)

    acc = pl.pallas_call(
        kernel,
        out_shape=jax.ShapeDtypeStruct((nc, _SUBLANES, _LANES), jnp.float32),
        grid_spec=pltpu.PrefetchScalarGridSpec(
            num_scalar_prefetch=0,
            grid=(nc, steps),
            in_specs=[
                pl.BlockSpec((tr, _LANES), lambda c, i: (c * steps + i, 0)),
                pl.BlockSpec((tr, _LANES), lambda c, i: (c * steps + i, 0)),
            ],
            # Accumulator-resident output: same block across the inner (reduction)
            # axis, one row per outer-parallel index.
            out_specs=pl.BlockSpec((1, _SUBLANES, _LANES), lambda c, i: (c, 0, 0)),
        ),
        compiler_params=pltpu.CompilerParams(
            dimension_semantics=("parallel", "arbitrary"),
            # 2 inputs x 2 buffers x 2 MiB (f32) + f32 temporaries << 32 MiB;
            # leaves headroom on v7x's 64 MiB physical VMEM.
            vmem_limit_bytes=32 * 1024 * 1024,
        ),
    )(m2d, t2d)

    # Single tiny final reduction + the one division by bs*n*n.
    return jnp.sum(acc) / jnp.float32(total)


def _reference(raw_scores, target):
    """Pure-JAX reference matching the PyTorch module: mean(BCE(sigmoid(x), t))."""
    m = raw_scores.astype(jnp.float32)
    t = target.astype(jnp.float32)
    p = jax.nn.sigmoid(m)
    bce = -(t * jnp.log(p) + (1.0 - t) * jnp.log(1.0 - p))
    return jnp.mean(bce)


if __name__ == "__main__":
    key = jax.random.PRNGKey(0)
    k1, k2 = jax.random.split(key)
    bs, n = 2, 16
    raw_scores = jax.random.normal(k1, (bs, n, n), dtype=jnp.float32)
    target = jax.random.bernoulli(k2, p=0.5, shape=(bs, n, n)).astype(jnp.float32)

    out = tsp_loss(raw_scores, target)
    out = jax.block_until_ready(out)

    ref = _reference(raw_scores, target)
    assert jnp.allclose(out, ref, rtol=1e-5, atol=1e-5), (out, ref)
    print("KERNEL_OK")
</pallas_src>

<mosaic_0001>
module attributes {stable_mosaic.version = 11 : i64} {
  func.func @kernel(%arg0: i32, %arg1: i32, %arg2: memref<8x128xf32, #tpu.memory_space<vmem>>, %arg3: memref<8x128xf32, #tpu.memory_space<vmem>>, %arg4: memref<1x8x128xf32, #tpu.memory_space<vmem>>) attributes {dimension_semantics = [#tpu.dimension_semantics<parallel>, #tpu.dimension_semantics<arbitrary>], iteration_bounds = array<i64: 1, 1>, scalar_prefetch = 0 : i64, scratch_operands = 0 : i64, tpu.core_type = #tpu.core_type<tc>, window_params = [{transform_indices = @transform_0, window_bounds = array<i64: 8, 128>}, {transform_indices = @transform_1, window_bounds = array<i64: 8, 128>}, {transform_indices = @transform_2, window_bounds = array<i64: 1, 8, 128>}]} {
    %c0_i32 = arith.constant 0 : i32
    %0 = arith.cmpi eq, %arg1, %c0_i32 : i32
    %1 = arith.extui %0 : i1 to i32
    %c0_i32_0 = arith.constant 0 : i32
    %2 = arith.cmpi ne, %1, %c0_i32_0 : i32
    scf.if %2 {
      %cst_14 = arith.constant 0.000000e+00 : f32
      %36 = vector.broadcast %cst_14 : f32 to vector<1x8x128xf32>
      %c0_15 = arith.constant 0 : index
      %c0_16 = arith.constant 0 : index
      %c0_17 = arith.constant 0 : index
      %37 = vector.load %arg4[%c0_15, %c0_16, %c0_17] : memref<1x8x128xf32, #tpu.memory_space<vmem>>, vector<1x8x128xf32>
      tpu.vector_store %arg4[%c0_15, %c0_16, %c0_17], %36 {strides = array<i32>} : memref<1x8x128xf32, #tpu.memory_space<vmem>>, vector<1x8x128xf32>,
    } else {
    }
    %c0 = arith.constant 0 : index
    %c0_1 = arith.constant 0 : index
    %3 = vector.load %arg2[%c0, %c0_1] : memref<8x128xf32, #tpu.memory_space<vmem>>, vector<8x128xf32>
    %c0_2 = arith.constant 0 : index
    %c0_3 = arith.constant 0 : index
    %4 = vector.load %arg3[%c0_2, %c0_3] : memref<8x128xf32, #tpu.memory_space<vmem>>, vector<8x128xf32>
    %cst = arith.constant 0.000000e+00 : f32
    %5 = vector.broadcast %cst : f32 to vector<8x128xf32>
    %6 = arith.maximumf %3, %5 : vector<8x128xf32>
    %7 = arith.mulf %3, %4 : vector<8x128xf32>
    %8 = arith.subf %6, %7 : vector<8x128xf32>
    %9 = math.absf %3 : vector<8x128xf32>
    %cst_4 = arith.constant 0.000000e+00 : f32
    %10 = vector.broadcast %cst_4 : f32 to vector<8x128xf32>
    %11 = arith.subf %10, %9 : vector<8x128xf32>
    %12 = math.exp %11 : vector<8x128xf32>
    %cst_5 = arith.constant 1.000000e+00 : f32
    %13 = vector.broadcast %cst_5 : f32 to vector<8x128xf32>
    %14 = arith.addf %13, %12 : vector<8x128xf32>
    %15 = math.log %14 : vector<8x128xf32>
    %16 = arith.addf %8, %15 : vector<8x128xf32>
    %c1_i32 = arith.constant 1 : i32
    %17 = arith.muli %arg0, %c1_i32 : i32
    %18 = arith.addi %17, %arg1 : i32
    %c1024_i32 = arith.constant 1024 : i32
    %19 = arith.muli %18, %c1024_i32 : i32
    %c512_i32 = arith.constant 512 : i32
    %20 = arith.subi %c512_i32, %19 : i32
    %21 = tpu.iota {dimensions = array<i32: 0>} : vector<8x128xi32>
    %22 = tpu.iota {dimensions = array<i32: 1>} : vector<8x128xi32>
    %c128_i32 = arith.constant 128 : i32
    %23 = vector.broadcast %c128_i32 : i32 to vector<8x128xi32>
    %24 = arith.muli %21, %23 : vector<8x128xi32>
    %25 = arith.addi %24, %22 : vector<8x128xi32>
    %26 = vector.broadcast %20 : i32 to vector<8x128xi32>
    %27 = arith.cmpi slt, %25, %26 : vector<8x128xi32>
    %cst_6 = arith.constant 0.000000e+00 : f32
    %28 = vector.broadcast %cst_6 : f32 to vector<8x128xf32>
    %29 = arith.select %27, %16, %28 : vector<8x128xi1>, vector<8x128xf32>
    %30 = vector.shape_cast %29 : vector<8x128xf32> to vector<1x8x128xf32>
    %cst_7 = arith.constant dense<0.000000e+00> : vector<8x128xf32>
    %31 = vector.multi_reduction <add>, %30, %cst_7 [0] : vector<1x8x128xf32> to vector<8x128xf32>
    %c0_8 = arith.constant 0 : index
    %c0_9 = arith.constant 0 : index
    %c0_10 = arith.constant 0 : index
    %32 = vector.load %arg4[%c0_8, %c0_9, %c0_10] : memref<1x8x128xf32, #tpu.memory_space<vmem>>, vector<1x8x128xf32>
    %33 = vector.shape_cast %31 : vector<8x128xf32> to vector<1x8x128xf32>
    %34 = arith.addf %32, %33 : vector<1x8x128xf32>
    %c0_11 = arith.constant 0 : index
    %c0_12 = arith.constant 0 : index
    %c0_13 = arith.constant 0 : index
    %35 = vector.load %arg4[%c0_11, %c0_12, %c0_13] : memref<1x8x128xf32, #tpu.memory_space<vmem>>, vector<1x8x128xf32>
    tpu.vector_store %arg4[%c0_11, %c0_12, %c0_13], %34 {strides = array<i32>} : memref<1x8x128xf32, #tpu.memory_space<vmem>>, vector<1x8x128xf32>,
    return
  }
  func.func @transform_0(%arg0: i32, %arg1: i32) -> (i32, i32) {
    %c1_i32 = arith.constant 1 : i32
    %0 = arith.muli %arg0, %c1_i32 : i32
    %1 = arith.addi %0, %arg1 : i32
    %c0_i32 = arith.constant 0 : i32
    %c0_i32_0 = arith.constant 0 : i32
    return %1, %c0_i32 : i32, i32
  }
  func.func @transform_1(%arg0: i32, %arg1: i32) -> (i32, i32) {
    %c1_i32 = arith.constant 1 : i32
    %0 = arith.muli %arg0, %c1_i32 : i32
    %1 = arith.addi %0, %arg1 : i32
    %c0_i32 = arith.constant 0 : i32
    %c0_i32_0 = arith.constant 0 : i32
    return %1, %c0_i32 : i32, i32
  }
  func.func @transform_2(%arg0: i32, %arg1: i32) -> (i32, i32, i32) {
    %c0_i32 = arith.constant 0 : i32
    %c0_i32_0 = arith.constant 0 : i32
    %c0_i32_1 = arith.constant 0 : i32
    return %arg0, %c0_i32, %c0_i32_0 : i32, i32, i32
  }
}

</mosaic_0001>

<llo_original>
// kernel: tpu_custom_call.1
$region0: #{tpu_custom_call.1}
  #allocation0 [shape = 'u32[]', space=smem, size = 0x4, offset = 0x4, fixed_abs, tag = 'smem constant byte address 0x4 - core index']
  #allocation1 [shape = 'u32[144,128]{1,0:T(1,128)}', space=vmem, size = 0x12000, scoped, tag = 'internal scratch']
  %s0 = inlined_call_operand.hbm [shape: f32[8,128], index: 0, kind: input, shape index: {}]
  %s1 = inlined_call_operand.hbm [shape: f32[8,128], index: 1, kind: input, shape index: {}]
  %s2 = inlined_call_operand.hbm [shape: f32[1,8,128], index: 2, kind: output, shape index: {}]
  %s3 = sld [smem:[#allocation0]]
  $region30: #{tpu_custom_call.1} parent=0
    _
  %s5 = ssub.s32 1, %s3
  %s6 = scalar_select 0, %s5, %s3
  $region1: #{tpu_custom_call.1} parent=0
    #allocation2 [shape = 'u8[4096]{0}', space=vmem, size = 0x1000, scoped, tag = 'input window, operand 0, single buffered']
    #allocation3 [shape = 's32[1]{0}', space=sflag, size = 0x4, scoped, tag = 'scoped memory for tpu_custom_call.1']
    #allocation4 [shape = 's32[1]{0}', space=sflag, size = 0x4, scoped, tag = 'scoped memory for tpu_custom_call.1']
    #allocation5 [shape = 'u8[4096]{0}', space=vmem, size = 0x1000, scoped, tag = 'input window, operand 1, single buffered']
    #allocation6 [shape = 's32[1]{0}', space=sflag, size = 0x4, scoped, tag = 'scoped memory for tpu_custom_call.1']
    #allocation7 [shape = 'u8[4096]{0}', space=vmem, size = 0x1000, scoped, tag = 'output window, operand 0, single buffered']
    %7 = vsyncpa [#allocation3], 0
    %8 = vsyncpa [#allocation6], 0
    %9 = vsyncpa [#allocation4], 0
    // Predicated region
    $region2: #{tpu_custom_call.1} parent=1 // pred_check
      _
    $region3: #{tpu_custom_call.1} parent=1 // pred_check_branch
      %11 = sbr.rel (0) target = $region5
    $region4: #{tpu_custom_call.1} parent=1 // pred_region
      %s12 = sadd.s32 0, 0
      %s14 = ssub.s32 128, 128
      %15 = vsyncadd [#allocation3], %s14
      %s16 = smul.addr %s12, 128
      %s17 = scalar_lea.hbm %s0, %s16
      %s19 = sshll.u32 [#allocation2], 4
      %s20 = int_to_ptr.vmem [resolvable:$true] %s19
      %22 = dma.hbm_to_vmem [thread:$0]  %s17, 128, %s20, [#allocation3]
    $region5: #{tpu_custom_call.1} parent=1 // pred_fallthru
      _
    // Predicated region
    $region6: #{tpu_custom_call.1} parent=1 // pred_check
      _
    $region7: #{tpu_custom_call.1} parent=1 // pred_check_branch
      %24 = sbr.rel (0) target = $region9
    $region8: #{tpu_custom_call.1} parent=1 // pred_region
      %s25 = sadd.s32 0, 0
      %s27 = ssub.s32 128, 128
      %28 = vsyncadd [#allocation6], %s27
      %s29 = smul.addr %s25, 128
      %s30 = scalar_lea.hbm %s1, %s29
      %s32 = sshll.u32 [#allocation5], 4
      %s33 = int_to_ptr.vmem [resolvable:$true] %s32
      %35 = dma.hbm_to_vmem [thread:$0]  %s30, 128, %s33, [#allocation6]
    $region9: #{tpu_custom_call.1} parent=1 // pred_fallthru
      _
    // Predicated region
    $region10: #{tpu_custom_call.1} parent=1 // pred_check
      _
    $region11: #{tpu_custom_call.1} parent=1 // pred_check_branch
      %37 = sbr.rel (0) target = $region13
    $region12: #{tpu_custom_call.1} parent=1 // pred_region
      %38 = dma.done [#allocation3], 128
    $region13: #{tpu_custom_call.1} parent=1 // pred_fallthru
      _
    // Predicated region
    $region14: #{tpu_custom_call.1} parent=1 // pred_check
      _
    $region15: #{tpu_custom_call.1} parent=1 // pred_check_branch
      %40 = sbr.rel (0) target = $region17
    $region16: #{tpu_custom_call.1} parent=1 // pred_region
      %41 = dma.done [#allocation6], 128
    $region17: #{tpu_custom_call.1} parent=1 // pred_fallthru
      _
    %s42 = sadd.s32 0, 0
    %s43 = sadd.s32 0, 0
    %p44 = scmp.eq.s32.totalorder 0, 0
    // Predicated region
    $region18: #{tpu_custom_call.1} parent=1 // pred_check
      %p45 = pneg %p44
    $region19: #{tpu_custom_call.1} parent=1 // pred_check_branch
      %47 = sbr.rel (%p45) target = $region21
    $region20: #{tpu_custom_call.1} parent=1 // pred_region
      %48 = vst [vmem:[#allocation7] sm:$0xff] 0.0
    $region21: #{tpu_custom_call.1} parent=1 // pred_fallthru
      _
    %v49 = vld [vmem:[#allocation2] sm:$0xff]
    %v50 = vld [vmem:[#allocation5] sm:$0xff]
    %v51 = vmax.f32 %v49, 0.0
    %v52 = vmul.f32 %v49, %v50
    %v53 = vsub.f32 %v51, %v52
    %v54 = vand.u32 2147483647, %v49
    %v55 = vsub.f32 0.0, %v54
    %v56 = vmul.f32 %v55, 1.442695
    %v57 = vpow.pop %v56
    %v58 = vadd.f32 %v57, 1.0
    %v59 = vlog2.pop %v58
    %v60 = vmul.f32 %v59, 0.6931472
    %v61 = vadd.f32 %v53, %v60
    %s62 = sadd.s32 0, 0
    %s63 = smul.u32 %s62, 1024
    %s64 = ssub.s32 512, %s63
    %v65 = vlaneseq
    %v66 = vshrl.u32 %v65, 7
    %v67 = vlaneseq
    %v68 = vand.u32 %v67, 127
    %v69 = vmul.u32 %v66, 128
    %v70 = vadd.s32 %v69, %v68
    %v71 = vstv %s64
    %vm72 = vcmp.lt.s32.totalorder %v70, %v71
    %v73 = vsel %vm72, %v61, 0.0
    %v74 = vadd.f32 %v73, 0.0
    %v75 = vld [vmem:[#allocation7] sm:$0xff]
    %v76 = vadd.f32 %v75, %v74
    %77 = vst [vmem:[#allocation7] sm:$0xff] %v76
    // Predicated region
    $region22: #{tpu_custom_call.1} parent=1 // pred_check
      _
    $region23: #{tpu_custom_call.1} parent=1 // pred_check_branch
      %79 = sbr.rel (0) target = $region25
    $region24: #{tpu_custom_call.1} parent=1 // pred_region
      %s81 = ssub.s32 128, 128
      %82 = vsyncadd [#allocation4], %s81
      %s84 = sshll.u32 [#allocation7], 4
      %s85 = int_to_ptr.vmem [resolvable:$true] %s84
      %87 = dma.vmem_to_hbm [thread:$0]  %s85, 128, %s2, [#allocation4]
    $region25: #{tpu_custom_call.1} parent=1 // pred_fallthru
      _
    // Predicated region
    $region26: #{tpu_custom_call.1} parent=1 // pred_check
      _
    $region27: #{tpu_custom_call.1} parent=1 // pred_check_branch
      %89 = sbr.rel (0) target = $region29
    $region28: #{tpu_custom_call.1} parent=1 // pred_region
      %90 = dma.done [#allocation4], 128
    $region29: #{tpu_custom_call.1} parent=1 // pred_fallthru
      _
    %91 = vsyncpa [#allocation3], 1
    %92 = vsyncpa [#allocation6], 1
    %93 = vsyncpa [#allocation4], 1

</llo_original>
